<compile_context>
chip_gen: v7x
topology: tpu7x:2x2x1
jax: 0.10.0
libtpu: 0.0.40
codegen_flags: <defaults>
</compile_context>

<pallas_src>
import functools
import math

import jax
import jax.numpy as jnp
from jax.experimental import pallas as pl
from jax.experimental.pallas import tpu as pltpu


def _round_up(x, m):
    return (x + m - 1) // m * m


# ---------------------------------------------------------------------------
# In-kernel exact-erf GELU (f32 polynomial erf, Abramowitz & Stegun 7.1.26)
# ---------------------------------------------------------------------------
_SQRT_HALF = 0.7071067811865476


def _erf_approx(x):
    # max abs error ~1.5e-7 — matches XLA's f32 erf accuracy; runs on VPU/EUP
    # while the MXU is busy, so the fused GELU epilogue is essentially free.
    t = 1.0 / (1.0 + 0.3275911 * jnp.abs(x))
    poly = t * (0.254829592 + t * (-0.284496736 + t * (1.421413741
            + t * (-1.453152027 + t * 1.061405429))))
    y = 1.0 - poly * jnp.exp(-(x * x))
    return jnp.where(x >= 0, y, -y)


def _gelu_exact(x):
    return 0.5 * x * (1.0 + _erf_approx(x * _SQRT_HALF))


# ---------------------------------------------------------------------------
# Kernel 1: PositionalEncoding2D (lane-dense one-hot MXU gather)
# ---------------------------------------------------------------------------
def _pos_enc_kernel(max_ref, coords_ref, tab_t_ref, out_ref, *, grid_size, V, Vp):
    # coords_ref: (2, TN)        lane-dense: patches on lanes, (x, y) on sublanes
    # tab_t_ref : (d_model, 2Vp) transposed block-diagonal [row_table ; col_table]
    # out_ref   : (d_model, TN)  lane-dense output tile (unmasked stores)
    m = max_ref[0, 0]                                   # global max coordinate (SMEM)
    gs = jnp.float32(grid_size)
    x = coords_ref[0:1, :]                              # (1, TN)
    y = coords_ref[1:2, :]                              # (1, TN)
    # Same op order as PyTorch: (coord / max_coord) * grid_size, trunc, clamp.
    # (All-zero coordinate bags are UB in the PyTorch module too; no guard added.)
    row_idx = jnp.clip(((y / m) * gs).astype(jnp.int32), 0, V - 1)
    col_idx = jnp.clip(((x / m) * gs).astype(jnp.int32), 0, V - 1)

    tn = coords_ref.shape[1]
    iota = jax.lax.broadcasted_iota(jnp.int32, (2 * Vp, tn), 0)          # (2Vp, TN)
    onehot = jnp.logical_or(iota == row_idx, iota == (col_idx + Vp)).astype(jnp.float32)
    # Single MXU matmul = row-gather + col-gather + concat, written straight to out_ref.
    out_ref[...] = jnp.dot(tab_t_ref[...], onehot, preferred_element_type=jnp.float32)


def positional_encoding_2d(coords, row_table, col_table):
    """coords: (B, Np, 2) f32; tables: (V, d_model//2) f32 -> (B, Np, d_model) f32."""
    B, Np, _ = coords.shape
    V, d_half = row_table.shape
    d_model = 2 * d_half
    grid_size = int(math.sqrt(Np)) + 1

    R = B * Np
    TN = min(512, _round_up(R, 128))
    R_pad = _round_up(R, TN)
    Vp = _round_up(V, 64)                        # 2*Vp multiple of 128 (MXU K dim)

    coords_t = coords.reshape(R, 2).T            # (2, R): patches -> lane axis
    if R_pad != R:
        coords_t = jnp.pad(coords_t, ((0, 0), (0, R_pad - R)))

    tab_t = jnp.zeros((d_model, 2 * Vp), jnp.float32)
    tab_t = tab_t.at[:d_half, :V].set(row_table.T)
    tab_t = tab_t.at[d_half:, Vp:Vp + V].set(col_table.T)

    max_coord = jnp.max(coords).reshape(1, 1).astype(jnp.float32)

    kernel = functools.partial(_pos_enc_kernel, grid_size=grid_size, V=V, Vp=Vp)
    out_t = pl.pallas_call(
        kernel,
        out_shape=jax.ShapeDtypeStruct((d_model, R_pad), jnp.float32),
        grid=(R_pad // TN,),
        in_specs=[
            pl.BlockSpec(memory_space=pltpu.SMEM),                 # max coordinate scalar
            pl.BlockSpec((2, TN), lambda i: (0, i)),               # lane-dense coords tile
            pl.BlockSpec((d_model, 2 * Vp), lambda i: (0, 0)),     # table (resident)
        ],
        out_specs=pl.BlockSpec((d_model, TN), lambda i: (0, i)),   # lane-dense output tile
        compiler_params=pltpu.CompilerParams(dimension_semantics=("parallel",)),
    )(max_coord, coords_t, tab_t)

    return out_t[:, :R].T.reshape(B, Np, d_model)


# ---------------------------------------------------------------------------
# Kernel 2: Linear (y = act(x @ W + b)), row-tiled, lane-dense (padded) N
# ---------------------------------------------------------------------------
def _linear_kernel(x_ref, w_ref, b_ref, o_ref, *, activation):
    y = jnp.dot(x_ref[...], w_ref[...], preferred_element_type=jnp.float32) + b_ref[...]
    if activation == "gelu":
        y = _gelu_exact(y)
    o_ref[...] = y


def linear(x, w, b, *, activation=None, row_tile=512):
    R, K = x.shape
    N = w.shape[1]
    N_pad = _round_up(N, 128)                     # lane-dense stores (v5e single vst slot)
    if N_pad != N:
        w = jnp.pad(w, ((0, 0), (0, N_pad - N)))
        b = jnp.pad(b, (0, N_pad - N))
    TR = min(row_tile, _round_up(R, 8))
    R_pad = _round_up(R, TR)
    x_p = jnp.pad(x, ((0, R_pad - R), (0, 0))) if R_pad != R else x
    out = pl.pallas_call(
        functools.partial(_linear_kernel, activation=activation),
        out_shape=jax.ShapeDtypeStruct((R_pad, N_pad), jnp.float32),
        grid=(R_pad // TR,),
        in_specs=[
            pl.BlockSpec((TR, K), lambda i: (i, 0)),
            pl.BlockSpec((K, N_pad), lambda i: (0, 0)),
            pl.BlockSpec((1, N_pad), lambda i: (0, 0)),
        ],
        out_specs=pl.BlockSpec((TR, N_pad), lambda i: (i, 0)),
        compiler_params=pltpu.CompilerParams(dimension_semantics=("parallel",)),
    )(x_p, w, b.reshape(1, N_pad))
    return out[:R, :N]


# ---------------------------------------------------------------------------
# Kernel 3: Linear + residual add + LayerNorm (attention out-projection epilogue)
# ---------------------------------------------------------------------------
def _linear_add_ln_kernel(x_ref, w_ref, b_ref, r_ref, g_ref, be_ref, o_ref, *, eps):
    y = (jnp.dot(x_ref[...], w_ref[...], preferred_element_type=jnp.float32)
         + b_ref[...] + r_ref[...])
    mu = jnp.mean(y, axis=-1, keepdims=True)
    yc = y - mu
    var = jnp.mean(yc * yc, axis=-1, keepdims=True)
    o_ref[...] = yc * jax.lax.rsqrt(var + eps) * g_ref[...] + be_ref[...]


def linear_add_ln(x, w, b, residual, gamma, beta, *, eps=1e-5, row_tile=512):
    R, K = x.shape
    N = w.shape[1]                                # LayerNorm over true N -> no N padding
    TR = min(row_tile, _round_up(R, 8))
    R_pad = _round_up(R, TR)
    if R_pad != R:
        x = jnp.pad(x, ((0, R_pad - R), (0, 0)))
        residual = jnp.pad(residual, ((0, R_pad - R), (0, 0)))
    out = pl.pallas_call(
        functools.partial(_linear_add_ln_kernel, eps=eps),
        out_shape=jax.ShapeDtypeStruct((R_pad, N), jnp.float32),
        grid=(R_pad // TR,),
        in_specs=[
            pl.BlockSpec((TR, K), lambda i: (i, 0)),
            pl.BlockSpec((K, N), lambda i: (0, 0)),
            pl.BlockSpec((1, N), lambda i: (0, 0)),
            pl.BlockSpec((TR, N), lambda i: (i, 0)),
            pl.BlockSpec((1, N), lambda i: (0, 0)),
            pl.BlockSpec((1, N), lambda i: (0, 0)),
        ],
        out_specs=pl.BlockSpec((TR, N), lambda i: (i, 0)),
        compiler_params=pltpu.CompilerParams(dimension_semantics=("parallel",)),
    )(x, w, b.reshape(1, N), residual, gamma.reshape(1, N), beta.reshape(1, N))
    return out[:R]


# ---------------------------------------------------------------------------
# Kernel 4: fused FFN  (LN(GELU(x W1 + b1) W2 + b2 + x)); 4D intermediate stays in VMEM
# ---------------------------------------------------------------------------
def _ffn_kernel(x_ref, w1_ref, b1_ref, w2_ref, b2_ref, g_ref, be_ref, o_ref, *, eps):
    x = x_ref[...]
    h = jnp.dot(x, w1_ref[...], preferred_element_type=jnp.float32) + b1_ref[...]
    h = _gelu_exact(h)
    y = jnp.dot(h, w2_ref[...], preferred_element_type=jnp.float32) + b2_ref[...] + x
    mu = jnp.mean(y, axis=-1, keepdims=True)
    yc = y - mu
    var = jnp.mean(yc * yc, axis=-1, keepdims=True)
    o_ref[...] = yc * jax.lax.rsqrt(var + eps) * g_ref[...] + be_ref[...]


def ffn_block(x, w1, b1, w2, b2, gamma, beta, *, eps=1e-5, row_tile=256):
    R, D = x.shape
    Dh = w1.shape[1]
    TR = min(row_tile, _round_up(R, 8))
    R_pad = _round_up(R, TR)
    x_p = jnp.pad(x, ((0, R_pad - R), (0, 0))) if R_pad != R else x
    out = pl.pallas_call(
        functools.partial(_ffn_kernel, eps=eps),
        out_shape=jax.ShapeDtypeStruct((R_pad, D), jnp.float32),
        grid=(R_pad // TR,),
        in_specs=[
            pl.BlockSpec((TR, D), lambda i: (i, 0)),
            pl.BlockSpec((D, Dh), lambda i: (0, 0)),
            pl.BlockSpec((1, Dh), lambda i: (0, 0)),
            pl.BlockSpec((Dh, D), lambda i: (0, 0)),
            pl.BlockSpec((1, D), lambda i: (0, 0)),
            pl.BlockSpec((1, D), lambda i: (0, 0)),
            pl.BlockSpec((1, D), lambda i: (0, 0)),
        ],
        out_specs=pl.BlockSpec((TR, D), lambda i: (i, 0)),
        compiler_params=pltpu.CompilerParams(
            dimension_semantics=("parallel",),
            vmem_limit_bytes=48 * 1024 * 1024),
    )(x_p, w1, b1.reshape(1, Dh), w2, b2.reshape(1, D),
      gamma.reshape(1, D), beta.reshape(1, D))
    return out[:R]


# ---------------------------------------------------------------------------
# Kernel 5: tiled attention, grid (B, q_tiles, H); head-mean weights accumulated in-kernel
# ---------------------------------------------------------------------------
def _attn_kernel(q_ref, kt_ref, v_ref, ctx_ref, w_ref, *, scale, s_valid, inv_heads):
    h = pl.program_id(2)
    q = q_ref[0, 0]                                    # (Tq, dk)
    kt = kt_ref[0, 0]                                  # (dk, Skv) lane-dense kv axis
    s = jnp.dot(q, kt, preferred_element_type=jnp.float32) * scale      # (Tq, Skv)
    if s_valid < kt.shape[-1]:                         # mask padded kv columns (static check)
        col = jax.lax.broadcasted_iota(jnp.int32, s.shape, 1)
        s = jnp.where(col < s_valid, s, -1e30)
    m = jnp.max(s, axis=-1, keepdims=True)
    p = jnp.exp(s - m)
    denom = jnp.sum(p, axis=-1, keepdims=True)
    p = p * pl.reciprocal(denom, approx=True)          # EUP divide, frees the VPU
    ctx_ref[0, 0] = jnp.dot(p, v_ref[0, 0], preferred_element_type=jnp.float32)

    @pl.when(h == 0)                                   # head-mean accumulator (resident over H)
    def _():
        w_ref[...] = jnp.zeros_like(w_ref)
    w_ref[0] += p * inv_heads


def attention_core(q, kT, v, scale, s_valid, num_heads, q_tile):
    # q: (B,H,Sq_pad,dk)  kT: (B,H,dk,Skv_pad)  v: (B,H,Skv_pad,dk)
    # TODO(synk): for dk < 128, packing several heads per MXU pass would raise lane utilization.
    B, H, Sq_pad, dk = q.shape
    Skv_pad = kT.shape[-1]
    n_q = Sq_pad // q_tile
    kernel = functools.partial(_attn_kernel, scale=scale, s_valid=s_valid,
                               inv_heads=1.0 / num_heads)
    return pl.pallas_call(
        kernel,
        grid=(B, n_q, H),
        in_specs=[
            pl.BlockSpec((1, 1, q_tile, dk), lambda b, qi, h: (b, h, qi, 0)),
            pl.BlockSpec((1, 1, dk, Skv_pad), lambda b, qi, h: (b, h, 0, 0)),
            pl.BlockSpec((1, 1, Skv_pad, dk), lambda b, qi, h: (b, h, 0, 0)),
        ],
        out_specs=(
            pl.BlockSpec((1, 1, q_tile, dk), lambda b, qi, h: (b, h, qi, 0)),
            pl.BlockSpec((1, q_tile, Skv_pad), lambda b, qi, h: (b, qi, 0)),
        ),
        out_shape=(
            jax.ShapeDtypeStruct((B, H, Sq_pad, dk), jnp.float32),
            jax.ShapeDtypeStruct((B, Sq_pad, Skv_pad), jnp.float32),
        ),
        compiler_params=pltpu.CompilerParams(
            dimension_semantics=("parallel", "parallel", "arbitrary"),
            vmem_limit_bytes=48 * 1024 * 1024),          # fits v7x's 64 MiB physical VMEM
    )(q, kT, v)


# ---------------------------------------------------------------------------
# Model forward (eval mode: all Dropout layers are identity)
# ---------------------------------------------------------------------------
def multi_head_attention(x, p, num_heads, *, q_tile=256):
    B, S, D = x.shape
    dk = D // num_heads
    x2 = x.reshape(B * S, D)

    # Fused QKV projection: one kernel, one read of x, lane-dense N = 3*D.
    qkv = linear(x2, p['w_qkv'], p['b_qkv'])
    qkv = qkv.reshape(B, S, 3, num_heads, dk)
    q = qkv[:, :, 0].transpose(0, 2, 1, 3)             # (B, H, S, dk)
    kT = qkv[:, :, 1].transpose(0, 2, 3, 1)             # (B, H, dk, S): lane-dense S for QK^T
    v = qkv[:, :, 2].transpose(0, 2, 1, 3)              # (B, H, S, dk)

    Tq = min(q_tile, _round_up(S, 8))
    Sq_pad = _round_up(S, Tq)
    Skv_pad = _round_up(S, 128)
    if Sq_pad != S:
        q = jnp.pad(q, ((0, 0), (0, 0), (0, Sq_pad - S), (0, 0)))
    if Skv_pad != S:
        kT = jnp.pad(kT, ((0, 0), (0, 0), (0, 0), (0, Skv_pad - S)))
        v = jnp.pad(v, ((0, 0), (0, 0), (0, Skv_pad - S), (0, 0)))

    ctx, wmean = attention_core(q, kT, v, 1.0 / math.sqrt(dk), S, num_heads, Tq)
    ctx = ctx[:, :, :S].transpose(0, 2, 1, 3).reshape(B * S, D)
    attn_vis = wmean[:, :S, :S]                          # already head-mean, (B, S, S)

    # Out-projection fused with residual-add + LayerNorm.
    out = linear_add_ln(ctx, p['wo'], p['bo'], x2, p['ln_g'], p['ln_b']).reshape(B, S, D)
    return out, attn_vis


def transformer_block(x, pos, p, num_heads):
    B, S, D = x.shape
    x_pos = x + pos
    f_out, f_attn = multi_head_attention(x_pos, p['fwd'], num_heads)
    # Backward branch without the flip round-trips: linears/LN are row-wise and softmax
    # attention is key-permutation-invariant / query-equivariant, so flip(in)->MHA->flip(out)
    # equals MHA on the unflipped input; only the vis weights need a query-axis flip
    # (PyTorch's flip(dims=[2]) of the reversed-computation weights == flip(axis=1) here).
    b_out, b_attn = multi_head_attention(x_pos, p['bwd'], num_heads)
    b_attn = jnp.flip(b_attn, axis=1)

    gate = p['gate']
    attn_out = gate * f_out + (1.0 - gate) * b_out
    combined_attn = (f_attn + b_attn) * 0.5

    a2 = attn_out.reshape(B * S, D)
    out = ffn_block(a2, p['w1'], p['b1'], p['w2'], p['b2'],
                    p['ln_g'], p['ln_b']).reshape(B, S, D)
    return out, combined_attn


def transmil_aggregator(features, coordinates, params, *, num_heads=8):
    B, N, _ = features.shape
    D = params['cls_token'].shape[-1]

    x = linear(features.reshape(B * N, -1), params['w_in'], params['b_in']).reshape(B, N, D)
    cls = jnp.broadcast_to(params['cls_token'], (B, 1, D))
    x = jnp.concatenate([cls, x], axis=1)                               # (B, N+1, D)

    cls_coords = jnp.zeros((B, 1, 2), jnp.float32)
    all_coords = jnp.concatenate([cls_coords, coordinates], axis=1)
    pos = positional_encoding_2d(all_coords, params['row_embed'], params['col_embed'])

    attention_maps = []
    for bp in params['blocks']:
        x, attn = transformer_block(x, pos, bp, num_heads)
        attention_maps.append(attn)

    cls_features = x[:, 0]
    patch_features = x[:, 1:]
    pf2 = patch_features.reshape(B * N, D)
    h = linear(pf2, params['wc1'], params['bc1'], activation="gelu")    # fused GELU epilogue
    instance_logits = linear(h, params['wc2'], params['bc2']).reshape(B, N, 2)
    final_attention = attention_maps[-1][:, 0, 1:]
    return {
        'bag_features': cls_features,
        'patch_features': patch_features,
        'instance_logits': instance_logits,
        'attention_weights': final_attention,
        'attention_maps': attention_maps,
    }


# ---------------------------------------------------------------------------
# Deterministic parameter init (no checkpoint; shapes follow the PyTorch module)
# ---------------------------------------------------------------------------
def init_params(key, *, input_dim, hidden_dim, num_layers, max_patches=10000):
    V = int(math.sqrt(max_patches)) + 1
    d_half = hidden_dim // 2

    def dense(k, fan_in, fan_out):
        kw, kb = jax.random.split(k)
        s = 1.0 / math.sqrt(fan_in)
        return (jax.random.normal(kw, (fan_in, fan_out), jnp.float32) * s,
                jax.random.normal(kb, (fan_out,), jnp.float32) * s)

    keys = jax.random.split(key, 8 + num_layers)
    params = {}
    params['w_in'], params['b_in'] = dense(keys[0], input_dim, hidden_dim)
    params['cls_token'] = jax.random.normal(keys[1], (1, 1, hidden_dim), jnp.float32)
    params['row_embed'] = jax.random.normal(keys[2], (V, d_half), jnp.float32)
    params['col_embed'] = jax.random.normal(keys[3], (V, d_half), jnp.float32)
    params['wc1'], params['bc1'] = dense(keys[4], hidden_dim, hidden_dim // 2)
    params['wc2'], params['bc2'] = dense(keys[5], hidden_dim // 2, 2)

    def mha_params(k):
        ks = jax.random.split(k, 4)
        wq, bq = dense(ks[0], hidden_dim, hidden_dim)
        wk, bk = dense(ks[1], hidden_dim, hidden_dim)
        wv, bv = dense(ks[2], hidden_dim, hidden_dim)
        p = {'w_qkv': jnp.concatenate([wq, wk, wv], axis=1),
             'b_qkv': jnp.concatenate([bq, bk, bv])}
        p['wo'], p['bo'] = dense(ks[3], hidden_dim, hidden_dim)
        p['ln_g'] = jnp.ones((hidden_dim,), jnp.float32)
        p['ln_b'] = jnp.zeros((hidden_dim,), jnp.float32)
        return p

    blocks = []
    for layer in range(num_layers):
        ks = jax.random.split(keys[6 + layer], 4)
        bp = {'fwd': mha_params(ks[0]), 'bwd': mha_params(ks[1])}
        bp['w1'], bp['b1'] = dense(ks[2], hidden_dim, hidden_dim * 4)
        bp['w2'], bp['b2'] = dense(ks[3], hidden_dim * 4, hidden_dim)
        bp['ln_g'] = jnp.ones((hidden_dim,), jnp.float32)
        bp['ln_b'] = jnp.zeros((hidden_dim,), jnp.float32)
        bp['gate'] = jnp.ones((1,), jnp.float32)
        blocks.append(bp)
    params['blocks'] = blocks
    return params


# ---------------------------------------------------------------------------
# Pure-JAX reference of the PyTorch forward (eval mode, verbatim incl. flips)
# ---------------------------------------------------------------------------
_HI = jax.lax.Precision.HIGHEST


def _ref_linear(x, w, b):
    return jnp.dot(x, w, precision=_HI) + b


def _ref_ln(y, g, b, eps=1e-5):
    mu = jnp.mean(y, -1, keepdims=True)
    yc = y - mu
    var = jnp.mean(yc * yc, -1, keepdims=True)
    return yc * jax.lax.rsqrt(var + eps) * g + b


def _ref_pos_encoding(coords, row_table, col_table):
    _, Np, _ = coords.shape
    V = row_table.shape[0]
    grid_size = int(math.sqrt(Np)) + 1
    m = jnp.max(coords)
    row_idx = jnp.clip(((coords[:, :, 1] / m) * grid_size).astype(jnp.int32), 0, V - 1)
    col_idx = jnp.clip(((coords[:, :, 0] / m) * grid_size).astype(jnp.int32), 0, V - 1)
    return jnp.concatenate([row_table[row_idx], col_table[col_idx]], axis=-1)


def _ref_mha(x, p, num_heads):
    B, S, D = x.shape
    dk = D // num_heads
    wq, wk, wv = p['w_qkv'][:, :D], p['w_qkv'][:, D:2 * D], p['w_qkv'][:, 2 * D:]
    bq, bk, bv = p['b_qkv'][:D], p['b_qkv'][D:2 * D], p['b_qkv'][2 * D:]
    q = _ref_linear(x, wq, bq).reshape(B, S, num_heads, dk).transpose(0, 2, 1, 3)
    k = _ref_linear(x, wk, bk).reshape(B, S, num_heads, dk).transpose(0, 2, 1, 3)
    v = _ref_linear(x, wv, bv).reshape(B, S, num_heads, dk).transpose(0, 2, 1, 3)
    s = jnp.einsum('bhqd,bhkd->bhqk', q, k, precision=_HI) / math.sqrt(dk)
    s = s - jnp.max(s, -1, keepdims=True)
    e = jnp.exp(s)
    w = e / jnp.sum(e, -1, keepdims=True)
    ctx = jnp.einsum('bhqk,bhkd->bhqd', w, v, precision=_HI)
    ctx = ctx.transpose(0, 2, 1, 3).reshape(B, S, D)
    o = _ref_linear(ctx, p['wo'], p['bo'])
    return _ref_ln(o + x, p['ln_g'], p['ln_b']), w.mean(axis=1)


def _ref_block(x, pos, p, num_heads):
    x_pos = x + pos
    f_out, f_attn = _ref_mha(x_pos, p['fwd'], num_heads)
    b_out, b_attn = _ref_mha(jnp.flip(x_pos, axis=1), p['bwd'], num_heads)
    b_out = jnp.flip(b_out, axis=1)
    b_attn = jnp.flip(b_attn, axis=2)
    attn_out = p['gate'] * f_out + (1.0 - p['gate']) * b_out
    combined = (f_attn + b_attn) * 0.5
    h = _ref_linear(attn_out, p['w1'], p['b1'])
    h = jax.nn.gelu(h, approximate=False)
    h = _ref_linear(h, p['w2'], p['b2'])
    return _ref_ln(h + attn_out, p['ln_g'], p['ln_b']), combined


def _ref_forward(features, coordinates, params, *, num_heads=8):
    B, _, _ = features.shape
    D = params['cls_token'].shape[-1]
    x = _ref_linear(features, params['w_in'], params['b_in'])
    cls = jnp.broadcast_to(params['cls_token'], (B, 1, D))
    x = jnp.concatenate([cls, x], axis=1)
    all_coords = jnp.concatenate([jnp.zeros((B, 1, 2), jnp.float32), coordinates], axis=1)
    pos = _ref_pos_encoding(all_coords, params['row_embed'], params['col_embed'])
    maps = []
    for bp in params['blocks']:
        x, a = _ref_block(x, pos, bp, num_heads)
        maps.append(a)
    cls_features = x[:, 0]
    patch_features = x[:, 1:]
    h = jax.nn.gelu(_ref_linear(patch_features, params['wc1'], params['bc1']),
                    approximate=False)
    instance_logits = _ref_linear(h, params['wc2'], params['bc2'])
    return {
        'bag_features': cls_features,
        'patch_features': patch_features,
        'instance_logits': instance_logits,
        'attention_weights': maps[-1][:, 0, 1:],
        'attention_maps': maps,
    }


if __name__ == "__main__":
    B, N = 2, 8                      # bags, patches per bag
    input_dim, hidden_dim = 64, 32
    num_layers, num_heads = 2, 8

    key = jax.random.PRNGKey(0)
    k_params, k_feat, k_coord = jax.random.split(key, 3)
    params = init_params(k_params, input_dim=input_dim, hidden_dim=hidden_dim,
                         num_layers=num_layers)
    features = jax.random.normal(k_feat, (B, N, input_dim), jnp.float32)
    coordinates = jax.random.uniform(k_coord, (B, N, 2), jnp.float32,
                                     minval=1.0, maxval=512.0)

    out = transmil_aggregator(features, coordinates, params, num_heads=num_heads)
    out = jax.block_until_ready(out)

    # Shape checks.
    assert out['bag_features'].shape == (B, hidden_dim)
    assert out['patch_features'].shape == (B, N, hidden_dim)
    assert out['instance_logits'].shape == (B, N, 2)
    assert out['attention_weights'].shape == (B, N)
    assert len(out['attention_maps']) == num_layers
    assert out['attention_maps'][0].shape == (B, N + 1, N + 1)

    # Strict check of the positional-encoding kernel (pure gather semantics).
    all_coords = jnp.concatenate([jnp.zeros((B, 1, 2), jnp.float32), coordinates], axis=1)
    pos_k = positional_encoding_2d(all_coords, params['row_embed'], params['col_embed'])
    pos_r = _ref_pos_encoding(all_coords, params['row_embed'], params['col_embed'])
    assert jnp.allclose(pos_k, pos_r, atol=1e-5, rtol=1e-5), "pos-encoding mismatch"

    # End-to-end check against the faithful PyTorch-semantics reference (also validates the
    # flip elimination).  Tolerance allows for approx-EUP reciprocal + polynomial-erf GELU.
    ref = _ref_forward(features, coordinates, params, num_heads=num_heads)
    for name in ('bag_features', 'patch_features', 'instance_logits', 'attention_weights'):
        assert jnp.allclose(out[name], ref[name], atol=2e-2, rtol=2e-2), name
    for a, b in zip(out['attention_maps'], ref['attention_maps']):
        assert jnp.allclose(a, b, atol=2e-2, rtol=2e-2), "attention map mismatch"

    print("KERNEL_OK")
</pallas_src>

<mosaic_0001>
module attributes {stable_mosaic.version = 11 : i64} {
  func.func @_linear_kernel(%arg0: i32, %arg1: memref<16x64xf32, #tpu.memory_space<vmem>>, %arg2: memref<64x128xf32, #tpu.memory_space<vmem>>, %arg3: memref<1x128xf32, #tpu.memory_space<vmem>>, %arg4: memref<16x128xf32, #tpu.memory_space<vmem>>) attributes {dimension_semantics = [#tpu.dimension_semantics<parallel>], iteration_bounds = array<i64: 1>, scalar_prefetch = 0 : i64, scratch_operands = 0 : i64, tpu.core_type = #tpu.core_type<tc>, window_params = [{transform_indices = @transform_0, window_bounds = array<i64: 16, 64>}, {pipeline_mode = #tpu.pipeline_mode<synchronous>, transform_indices = @transform_1, window_bounds = array<i64: 64, 128>}, {pipeline_mode = #tpu.pipeline_mode<synchronous>, transform_indices = @transform_2, window_bounds = array<i64: 1, 128>}, {transform_indices = @transform_3, window_bounds = array<i64: 16, 128>}]} {
    %c0 = arith.constant 0 : index
    %c0_0 = arith.constant 0 : index
    %0 = vector.load %arg1[%c0, %c0_0] : memref<16x64xf32, #tpu.memory_space<vmem>>, vector<16x64xf32>
    %c0_1 = arith.constant 0 : index
    %c0_2 = arith.constant 0 : index
    %1 = vector.load %arg2[%c0_1, %c0_2] : memref<64x128xf32, #tpu.memory_space<vmem>>, vector<64x128xf32>
    %cst = arith.constant dense<0.000000e+00> : vector<16x128xf32>
    %2 = tpu.matmul %0, %1, %cst {dimension_numbers = #tpu.dot_dimension_numbers<[1], [0], [0], [1], [0, 0, 1, 1], [], []>} : vector<16x64xf32>, vector<64x128xf32>, vector<16x128xf32> -> vector<16x128xf32>
    %c0_3 = arith.constant 0 : index
    %c0_4 = arith.constant 0 : index
    %3 = vector.load %arg3[%c0_3, %c0_4] : memref<1x128xf32, #tpu.memory_space<vmem>>, vector<1x128xf32>
    %4 = vector.broadcast %3 : vector<1x128xf32> to vector<16x128xf32>
    %5 = arith.addf %2, %4 : vector<16x128xf32>
    %c0_5 = arith.constant 0 : index
    %c0_6 = arith.constant 0 : index
    %6 = vector.load %arg4[%c0_5, %c0_6] : memref<16x128xf32, #tpu.memory_space<vmem>>, vector<16x128xf32>
    tpu.vector_store %arg4[%c0_5, %c0_6], %5 {strides = array<i32>} : memref<16x128xf32, #tpu.memory_space<vmem>>, vector<16x128xf32>,
    return
  }
  func.func @transform_0(%arg0: i32) -> (i32, i32) {
    %c0_i32 = arith.constant 0 : i32
    %c0_i32_0 = arith.constant 0 : i32
    return %arg0, %c0_i32 : i32, i32
  }
  func.func @transform_1(%arg0: i32) -> (i32, i32) {
    %c0_i32 = arith.constant 0 : i32
    %c0_i32_0 = arith.constant 0 : i32
    %c0_i32_1 = arith.constant 0 : i32
    return %c0_i32, %c0_i32_0 : i32, i32
  }
  func.func @transform_2(%arg0: i32) -> (i32, i32) {
    %c0_i32 = arith.constant 0 : i32
    %c0_i32_0 = arith.constant 0 : i32
    %c0_i32_1 = arith.constant 0 : i32
    return %c0_i32, %c0_i32_0 : i32, i32
  }
  func.func @transform_3(%arg0: i32) -> (i32, i32) {
    %c0_i32 = arith.constant 0 : i32
    %c0_i32_0 = arith.constant 0 : i32
    return %arg0, %c0_i32 : i32, i32
  }
}

</mosaic_0001>

<llo_original>
// kernel: tpu_custom_call.1
$region0: #{tpu_custom_call.1}
  #allocation0 [shape = 'u32[]', space=smem, size = 0x4, offset = 0x4, fixed_abs, tag = 'smem constant byte address 0x4 - core index']
  #allocation1 [shape = 'u32[144,128]{1,0:T(1,128)}', space=vmem, size = 0x12000, scoped, tag = 'internal scratch']
  %s0 = inlined_call_operand.hbm [shape: f32[16,64], index: 0, kind: input, shape index: {}]
  %s1 = inlined_call_operand.hbm [shape: f32[64,128], index: 1, kind: input, shape index: {}]
  %s2 = inlined_call_operand.vmem [shape: f32[1,128], index: 2, kind: input, shape index: {}]
  %s3 = inlined_call_operand.hbm [shape: f32[16,128], index: 3, kind: output, shape index: {}]
  %s4 = sld [smem:[#allocation0]]
  $region30: #{tpu_custom_call.1} parent=0
    _
  %s6 = ssub.s32 1, %s4
  %s7 = scalar_select 0, %s6, %s4
  $region1: #{tpu_custom_call.1} parent=0
    #allocation2 [shape = 'u8[8192]{0}', space=vmem, size = 0x2000, scoped, tag = 'input window, operand 0, single buffered']
    #allocation3 [shape = 's32[1]{0}', space=sflag, size = 0x4, scoped, tag = 'scoped memory for tpu_custom_call.1']
    #allocation4 [shape = 's32[1]{0}', space=sflag, size = 0x4, scoped, tag = 'scoped memory for tpu_custom_call.1']
    #allocation5 [shape = 'u8[32768]{0}', space=vmem, size = 0x8000, scoped, tag = 'input window, operand 1, single buffered']
    #allocation6 [shape = 's32[1]{0}', space=sflag, size = 0x4, scoped, tag = 'scoped memory for tpu_custom_call.1']
    #allocation7 [shape = 'u8[8192]{0}', space=vmem, size = 0x2000, scoped, tag = 'output window, operand 0, single buffered']
    %8 = vsyncpa [#allocation3], 0
    %9 = vsyncpa [#allocation6], 0
    %10 = vsyncpa [#allocation4], 0
    // Predicated region
    $region2: #{tpu_custom_call.1} parent=1 // pred_check
      _
    $region3: #{tpu_custom_call.1} parent=1 // pred_check_branch
      %12 = sbr.rel (0) target = $region5
    $region4: #{tpu_custom_call.1} parent=1 // pred_region
      %s14 = ssub.s32 256, 256
      %15 = vsyncadd [#allocation3], %s14
      %s16 = sshll.u32 [#allocation2], 4
      %s17 = int_to_ptr.vmem [resolvable:$true] %s16
      %22 = dma.hbm_to_vmem [thread:$0]  %s0, 256, %s17, [#allocation3], 128, 128, 8
    $region5: #{tpu_custom_call.1} parent=1 // pred_fallthru
      _
    // Predicated region
    $region6: #{tpu_custom_call.1} parent=1 // pred_check
      _
    $region7: #{tpu_custom_call.1} parent=1 // pred_check_branch
      %24 = sbr.rel (0) target = $region9
    $region8: #{tpu_custom_call.1} parent=1 // pred_region
      %s26 = ssub.s32 1024, 1024
      %27 = vsyncadd [#allocation6], %s26
      %s28 = sshll.u32 [#allocation5], 4
      %s29 = int_to_ptr.vmem [resolvable:$true] %s28
      %34 = dma.hbm_to_vmem [thread:$0]  %s1, 1024, %s29, [#allocation6], 128, 128, 8
    $region9: #{tpu_custom_call.1} parent=1 // pred_fallthru
      _
    // Predicated region
    $region10: #{tpu_custom_call.1} parent=1 // pred_check
      _
    $region11: #{tpu_custom_call.1} parent=1 // pred_check_branch
      %36 = sbr.rel (0) target = $region13
    $region12: #{tpu_custom_call.1} parent=1 // pred_region
      _
    $region13: #{tpu_custom_call.1} parent=1 // pred_fallthru
      _
    // Predicated region
    $region14: #{tpu_custom_call.1} parent=1 // pred_check
      _
    $region15: #{tpu_custom_call.1} parent=1 // pred_check_branch
      %38 = sbr.rel (0) target = $region17
    $region16: #{tpu_custom_call.1} parent=1 // pred_region
      %39 = dma.done [#allocation3], 256
    $region17: #{tpu_custom_call.1} parent=1 // pred_fallthru
      _
    // Predicated region
    $region18: #{tpu_custom_call.1} parent=1 // pred_check
      _
    $region19: #{tpu_custom_call.1} parent=1 // pred_check_branch
      %41 = sbr.rel (0) target = $region21
    $region20: #{tpu_custom_call.1} parent=1 // pred_region
      %42 = dma.done [#allocation6], 1024
    $region21: #{tpu_custom_call.1} parent=1 // pred_fallthru
      _
    %v43 = vld [vmem:[#allocation2] sm:$0xff]
    %v44 = vld [vmem:[#allocation2 + $0x8] sm:$0xff]
    %v45 = vld [vmem:[#allocation5] sm:$0xff]
    %v46 = vld [vmem:[#allocation5 + $0x8] sm:$0xff]
    %v47 = vld [vmem:[#allocation5 + $0x10] sm:$0xff]
    %v48 = vld [vmem:[#allocation5 + $0x18] sm:$0xff]
    %v49 = vld [vmem:[#allocation5 + $0x20] sm:$0xff]
    %v50 = vld [vmem:[#allocation5 + $0x28] sm:$0xff]
    %v51 = vld [vmem:[#allocation5 + $0x30] sm:$0xff]
    %v52 = vld [vmem:[#allocation5 + $0x38] sm:$0xff]
    %v53 = vld [vmem:[%s2] sm:$0x1]
    %v55 = vlaneseq
    %v56 = vshrl.u32 %v55, 7
    %v57 = vsub.s32 0, %v56
    %v58 = vrot.slane %v53, %v57
    %vm60 = vcmask 523264
    %v62 = vsel %vm60, %v43, 0
    %v65 = vsel %vm60, %v44, 0
    %67 = vmatprep.subr.mxu0 0.0
    %68 = vmatpush1.msra.mxu0 %v45
    %69 = vmatprep.subr.mxu0 0.0
    %70 = vmatpush1.msra.mxu0 %v46
    %71 = vmatprep.subr.mxu0 0.0
    %72 = vmatpush1.msra.mxu0 %v47
    %73 = vmatprep.subr.mxu0 0.0
    %74 = vmatpush1.msra.mxu0 %v48
    %75 = vmatprep.subr.mxu0 0.0
    %76 = vmatpush1.msra.mxu0 %v49
    %77 = vmatprep.subr.mxu0 0.0
    %78 = vmatpush1.msra.mxu0 %v50
    %79 = vmatprep.subr.mxu0 0.0
    %80 = vmatpush1.msra.mxu0 %v51
    %81 = vmatprep.subr.mxu0 0.0
    %82 = vmatpush1.msra.mxu0 %v52
    %83 = vmatprep.subr.mxu0 0.0
    %84 = vmatpush1.msra.mxu0 0.0
    %85 = vmatprep.subr.mxu0 0.0
    %86 = vmatpush1.msra.mxu0 0.0
    %87 = vmatprep.subr.mxu0 0.0
    %88 = vmatpush1.msra.mxu0 0.0
    %89 = vmatprep.subr.mxu0 0.0
    %90 = vmatpush1.msra.mxu0 0.0
    %91 = vmatprep.subr.mxu0 0.0
    %92 = vmatpush1.msra.mxu0 0.0
    %93 = vmatprep.subr.mxu0 0.0
    %94 = vmatpush1.msra.mxu0 0.0
    %95 = vmatprep.subr.mxu0 0.0
    %96 = vmatpush1.msra.mxu0 0.0
    %97 = vmatprep.subr.mxu0 0.0
    %98 = vmatpush1.msra.mxu0 0.0
    %99 = vmatprep.subr.mxu0 0.0
    %100 = vmatpush1.msra.mxu0 0.0
    %101 = vmatprep.subr.mxu0 0.0
    %102 = vmatpush1.msra.mxu0 0.0
    %103 = vmatprep.subr.mxu0 0.0
    %104 = vmatpush1.msra.mxu0 0.0
    %105 = vmatprep.subr.mxu0 0.0
    %106 = vmatpush1.msra.mxu0 0.0
    %107 = vmatprep.subr.mxu0 0.0
    %108 = vmatpush1.msra.mxu0 0.0
    %109 = vmatprep.subr.mxu0 0.0
    %110 = vmatpush1.msra.mxu0 0.0
    %111 = vmatprep.subr.mxu0 0.0
    %112 = vmatpush1.msra.mxu0 0.0
    %113 = vmatprep.subr.mxu0 0.0
    %114 = vmatpush1.msra.mxu0 0.0
    %115 = vmatprep.subr.mxu0 0.0
    %116 = vmatpush1.msra.mxu0 0.0
    %117 = vmatprep.subr.mxu0 0.0
    %118 = vmatpush1.msra.mxu0 0.0
    %119 = vmatprep.subr.mxu0 0.0
    %120 = vmatpush1.msra.mxu0 0.0
    %121 = vmatprep.subr.mxu0 0.0
    %122 = vmatpush1.msra.mxu0 0.0
    %123 = vmatprep.subr.mxu0 0.0
    %124 = vmatpush1.msra.mxu0 0.0
    %125 = vmatprep.subr.mxu0 0.0
    %126 = vmatpush1.msra.mxu0 0.0
    %127 = vmatprep.subr.mxu0 0.0
    %128 = vmatpush1.msra.mxu0 0.0
    %129 = vmatprep.subr.mxu0 0.0
    %130 = vmatpush1.msra.mxu0 0.0
    %131 = vmatprep.mubr.f32.mxu0 0.0
    %132 = vmatmul.mubr.f32.gmra.mrb[0].mxu0 %v62
    %v133 = vpop.f32.mrb[0].mxu0
    %v134 = vadd.f32 %v58, %v133
    %v135 = vpop.f32.mrb[0].mxu0
    %136 = vmatprep.mubr.f32.mxu0 0.0
    %137 = vmatmul.mubr.f32.gmra.mrb[0].mxu0 %v65
    %v138 = vpop.f32.mrb[0].mxu0
    %v139 = vadd.f32 %v58, %v138
    %v140 = vpop.f32.mrb[0].mxu0
    %141 = vdwg.mxu0
    %142 = vst [vmem:[#allocation7] sm:$0xff] %v134
    %143 = vst [vmem:[#allocation7 + $0x8] sm:$0xff] %v139
    // Predicated region
    $region22: #{tpu_custom_call.1} parent=1 // pred_check
      _
    $region23: #{tpu_custom_call.1} parent=1 // pred_check_branch
      %145 = sbr.rel (0) target = $region25
    $region24: #{tpu_custom_call.1} parent=1 // pred_region
      %s147 = ssub.s32 256, 256
      %148 = vsyncadd [#allocation4], %s147
      %s149 = sshll.u32 [#allocation7], 4
      %s150 = int_to_ptr.vmem [resolvable:$true] %s149
      %155 = dma.vmem_to_hbm [thread:$0]  %s150, 256, %s3, [#allocation4], 128, 128, 8
    $region25: #{tpu_custom_call.1} parent=1 // pred_fallthru
      _
    // Predicated region
    $region26: #{tpu_custom_call.1} parent=1 // pred_check
      _
    $region27: #{tpu_custom_call.1} parent=1 // pred_check_branch
      %157 = sbr.rel (0) target = $region29
    $region28: #{tpu_custom_call.1} parent=1 // pred_region
      %158 = dma.done [#allocation4], 256
    $region29: #{tpu_custom_call.1} parent=1 // pred_fallthru
      _
    %159 = vsyncpa [#allocation3], 1
    %160 = vsyncpa [#allocation6], 1
    %161 = vsyncpa [#allocation4], 1

</llo_original>
